<compile_context>
chip_gen: v7x
topology: tpu7x:2x2x1
jax: 0.10.0
libtpu: 0.0.40
codegen_flags: <defaults>
</compile_context>

<pallas_src>
import jax
import jax.numpy as jnp
from jax.experimental import pallas as pl
from jax.experimental.pallas import tpu as pltpu  # noqa: F401  (kept for TPU-specific tuning)


def _gcn_kernel(x_ref, edge_ref, param_ref, out_ref):
    x_col = x_ref[...]                    # (N, 1)  f32 node features (Fin == 1)
    edges = edge_ref[...]                 # (2, E)  i32: row 0 = src, row 1 = dst (lane-major)
    params = param_ref[...]               # (3, Hp) f32: rows = [w_l | 0], [w_r | 0], [bias | 0]
    N = x_col.shape[0]
    E = edges.shape[1]
    Hp = params.shape[1]

    src_row = edges[0:1, :]               # (1, E)
    dst_row = edges[1:2, :]               # (1, E)
    w_l = params[0:1, :]                  # (1, Hp)
    w_r = params[1:2, :]                  # (1, Hp)
    b = params[2:3, :]                    # (1, Hp)

    # Node index down the sublanes, shared by the gather and the scatter one-hots.
    node_ids = jax.lax.broadcasted_iota(jnp.int32, (N, E), 0)           # (N, E)

    # --- gather: msg[e] = x[src[e]]  (VPU select + XLU sublane reduce; no MXU) ---
    msg_row = jnp.sum(jnp.where(src_row == node_ids, x_col, 0.0),
                      axis=0, keepdims=True)                            # (1, E)

    # --- scatter-mean fused with W_l -------------------------------------------------
    # dst one-hot (bool) is shared by the matmul LHS and the in-degree reduce.
    dst_hit = dst_row == node_ids                                       # (N, E)

    # in-degree: XLU lane-reduce of the one-hot (exact; 0/1 values).
    deg = jnp.sum(dst_hit.astype(jnp.float32), axis=1, keepdims=True)   # (N, 1)

    # msg-weighted scatter one-hot (bf16: one-hot exact, msg loses mantissa bits) and a
    # W_l-broadcast RHS -> a single (N,E)@(E,Hp) MXU matmul yields agg_sum ⊗ W_l directly.
    scatter_w = jnp.where(dst_hit, msg_row, 0.0).astype(jnp.bfloat16)   # (N, E)
    rhs = jnp.broadcast_to(w_l.astype(jnp.bfloat16), (E, Hp))           # (E, Hp)
    sums = jnp.dot(scatter_w, rhs,
                   preferred_element_type=jnp.float32)                  # (N, Hp) = agg_sum ⊗ W_l

    inv_deg = pl.reciprocal(jnp.maximum(deg, 1.0), approx=True)         # EUP slot (free)

    # --- SAGEConv linear epilogue: lane-dense (N, Hp) VPU work ---
    h = sums * inv_deg + x_col * w_r + b                                # (N, Hp)

    # dropout(p=0.2) in eval mode == identity
    # global_max_pool with batch == 0 everywhere -> max over all nodes
    out_ref[...] = jnp.max(h, axis=0, keepdims=True)                    # (1, Hp), unmasked vst


def gcn_forward(x, edge_index, w_l, w_r, bias):
    """x: [N, 1] f32, edge_index: [2, E] i32, w_l/w_r: [1, H] f32, bias: [1, H] f32."""
    N, fin = x.shape
    assert fin == 1, "SAGEConv(1, hidden): Fin must be 1 for the outer-product formulation"
    E = edge_index.shape[1]
    H = w_l.shape[1]
    Hp = ((H + 127) // 128) * 128                     # lane-dense hidden width (>= 128)

    x_col = x.astype(jnp.float32)                     # (N, 1)
    edges = edge_index.astype(jnp.int32)              # (2, E): src row 0, dst row 1

    # Stack all per-hidden parameters into one (3, Hp) array (zero-padded lanes >= H are
    # inert: agg pad = 0, x*w_r pad = 0, bias pad = 0, so the pooled pad lanes are sliced off).
    params = jnp.zeros((3, Hp), dtype=jnp.float32)
    params = params.at[0, :H].set(w_l.reshape(-1).astype(jnp.float32))
    params = params.at[1, :H].set(w_r.reshape(-1).astype(jnp.float32))
    params = params.at[2, :H].set(bias.reshape(-1).astype(jnp.float32))

    full = lambda shape: pl.BlockSpec(shape, lambda: tuple(0 for _ in shape))

    out = pl.pallas_call(
        _gcn_kernel,
        out_shape=jax.ShapeDtypeStruct((1, Hp), jnp.float32),
        in_specs=[
            full((N, 1)),
            full((2, E)),
            full((3, Hp)),
        ],
        out_specs=full((1, Hp)),
    )(x_col, edges, params)
    return out[:, :H]


def gcn_reference(x, edge_index, w_l, w_r, bias):
    """Plain-JAX reference of the same forward (for a sanity check)."""
    N = x.shape[0]
    src, dst = edge_index[0], edge_index[1]
    msg = x[src]                                                  # (E, 1)
    agg_sum = jax.ops.segment_sum(msg, dst, num_segments=N)       # (N, 1)
    deg = jax.ops.segment_sum(jnp.ones((edge_index.shape[1], 1), jnp.float32),
                              dst, num_segments=N)
    agg = agg_sum / jnp.maximum(deg, 1.0)
    h = agg @ w_l + x @ w_r + bias
    return jnp.max(h, axis=0, keepdims=True)


if __name__ == "__main__":
    key = jax.random.PRNGKey(0)
    N, E, Fin, H = 16, 32, 1, 32

    k1, k2, k3, k4, k5 = jax.random.split(key, 5)
    x = jax.random.normal(k1, (N, Fin), dtype=jnp.float32)
    src = jax.random.randint(k2, (E,), 0, N, dtype=jnp.int32)
    dst = jax.random.randint(k3, (E,), 0, N, dtype=jnp.int32)
    edge_index = jnp.stack([src, dst], axis=0)                    # [2, E]

    # Deterministic SAGEConv(1, H) parameters: lin_l (neighbor) and lin_r (root) + bias.
    w_l = jax.random.normal(k4, (Fin, H), dtype=jnp.float32) * 0.1
    w_r = jax.random.normal(k5, (Fin, H), dtype=jnp.float32) * 0.1
    bias = jnp.zeros((1, H), dtype=jnp.float32)

    out = gcn_forward(x, edge_index, w_l, w_r, bias)
    out = jax.block_until_ready(out)

    ref = gcn_reference(x, edge_index, w_l, w_r, bias)
    assert out.shape == (1, H)
    # Tolerance covers pl.reciprocal(approx=True) in the mean aggregation plus the bf16
    # operands of the fused scatter/W_l matmul (worst-case rel err ~2^-8 on O(1) values).
    assert jnp.allclose(out, ref, atol=2e-2, rtol=2e-2), "mismatch vs reference"

    print("KERNEL_OK")
</pallas_src>

<mosaic_0001>
module attributes {stable_mosaic.version = 11 : i64} {
  func.func @_gcn_kernel(%arg0: memref<16x1xf32, #tpu.memory_space<vmem>>, %arg1: memref<2x32xi32, #tpu.memory_space<vmem>>, %arg2: memref<3x128xf32, #tpu.memory_space<vmem>>, %arg3: memref<1x128xf32, #tpu.memory_space<vmem>>) attributes {dimension_semantics = [], scalar_prefetch = 0 : i64, scratch_operands = 0 : i64, tpu.core_type = #tpu.core_type<tc>} {
    %c0 = arith.constant 0 : index
    %c0_0 = arith.constant 0 : index
    %0 = vector.load %arg0[%c0, %c0_0] : memref<16x1xf32, #tpu.memory_space<vmem>>, vector<16x1xf32>
    %c0_1 = arith.constant 0 : index
    %c0_2 = arith.constant 0 : index
    %1 = vector.load %arg1[%c0_1, %c0_2] : memref<2x32xi32, #tpu.memory_space<vmem>>, vector<2x32xi32>
    %c0_3 = arith.constant 0 : index
    %c0_4 = arith.constant 0 : index
    %2 = vector.load %arg2[%c0_3, %c0_4] : memref<3x128xf32, #tpu.memory_space<vmem>>, vector<3x128xf32>
    %3 = vector.extract_strided_slice %1 {offsets = [0, 0], sizes = [1, 32], strides = [1, 1]} : vector<2x32xi32> to vector<1x32xi32>
    %4 = vector.extract_strided_slice %1 {offsets = [1, 0], sizes = [1, 32], strides = [1, 1]} : vector<2x32xi32> to vector<1x32xi32>
    %5 = vector.extract_strided_slice %2 {offsets = [0, 0], sizes = [1, 128], strides = [1, 1]} : vector<3x128xf32> to vector<1x128xf32>
    %6 = vector.extract_strided_slice %2 {offsets = [1, 0], sizes = [1, 128], strides = [1, 1]} : vector<3x128xf32> to vector<1x128xf32>
    %7 = vector.extract_strided_slice %2 {offsets = [2, 0], sizes = [1, 128], strides = [1, 1]} : vector<3x128xf32> to vector<1x128xf32>
    %8 = tpu.iota {dimensions = array<i32: 0>} : vector<16x32xi32>
    %9 = vector.broadcast %3 : vector<1x32xi32> to vector<16x32xi32>
    %10 = arith.cmpi eq, %9, %8 : vector<16x32xi32>
    %cst = arith.constant 0.000000e+00 : f32
    %11 = vector.shape_cast %0 : vector<16x1xf32> to vector<16x1xf32>
    %12 = vector.broadcast %11 : vector<16x1xf32> to vector<16x32xf32>
    %13 = vector.broadcast %cst : f32 to vector<16x32xf32>
    %14 = arith.select %10, %12, %13 : vector<16x32xi1>, vector<16x32xf32>
    %cst_5 = arith.constant dense<0.000000e+00> : vector<32xf32>
    %15 = vector.multi_reduction <add>, %14, %cst_5 [0] : vector<16x32xf32> to vector<32xf32>
    %16 = vector.shape_cast %15 : vector<32xf32> to vector<1x32xf32>
    %17 = vector.broadcast %4 : vector<1x32xi32> to vector<16x32xi32>
    %18 = arith.cmpi eq, %17, %8 : vector<16x32xi32>
    %19 = arith.extui %18 : vector<16x32xi1> to vector<16x32xi32>
    %20 = arith.sitofp %19 : vector<16x32xi32> to vector<16x32xf32>
    %cst_6 = arith.constant dense<0.000000e+00> : vector<16xf32>
    %21 = vector.multi_reduction <add>, %20, %cst_6 [1] : vector<16x32xf32> to vector<16xf32>
    %22 = vector.shape_cast %21 : vector<16xf32> to vector<16x1xf32>
    %cst_7 = arith.constant 0.000000e+00 : f32
    %23 = vector.shape_cast %16 : vector<1x32xf32> to vector<1x32xf32>
    %24 = vector.broadcast %23 : vector<1x32xf32> to vector<16x32xf32>
    %25 = vector.broadcast %cst_7 : f32 to vector<16x32xf32>
    %26 = arith.select %18, %24, %25 : vector<16x32xi1>, vector<16x32xf32>
    %27 = arith.truncf %26 : vector<16x32xf32> to vector<16x32xbf16>
    %28 = arith.truncf %5 : vector<1x128xf32> to vector<1x128xbf16>
    %29 = vector.shape_cast %28 : vector<1x128xbf16> to vector<1x128xbf16>
    %30 = vector.broadcast %29 : vector<1x128xbf16> to vector<32x128xbf16>
    %cst_8 = arith.constant dense<0.000000e+00> : vector<16x128xf32>
    %31 = tpu.matmul %27, %30, %cst_8 {dimension_numbers = #tpu.dot_dimension_numbers<[1], [0], [0], [1], [0, 0, 1, 1], [], []>} : vector<16x32xbf16>, vector<32x128xbf16>, vector<16x128xf32> -> vector<16x128xf32>
    %cst_9 = arith.constant 1.000000e+00 : f32
    %32 = vector.broadcast %cst_9 : f32 to vector<16x1xf32>
    %33 = arith.maximumf %22, %32 : vector<16x1xf32>
    %34 = tpu.reciprocal %33 {approx = true} : vector<16x1xf32> -> vector<16x1xf32>
    %35 = vector.broadcast %34 : vector<16x1xf32> to vector<16x128xf32>
    %36 = arith.mulf %31, %35 : vector<16x128xf32>
    %37 = vector.broadcast %0 : vector<16x1xf32> to vector<16x128xf32>
    %38 = vector.broadcast %6 : vector<1x128xf32> to vector<16x128xf32>
    %39 = arith.mulf %37, %38 : vector<16x128xf32>
    %40 = arith.addf %36, %39 : vector<16x128xf32>
    %41 = vector.broadcast %7 : vector<1x128xf32> to vector<16x128xf32>
    %42 = arith.addf %40, %41 : vector<16x128xf32>
    %cst_10 = arith.constant dense<0xFF800000> : vector<128xf32>
    %43 = vector.multi_reduction <maximumf>, %42, %cst_10 [0] : vector<16x128xf32> to vector<128xf32>
    %44 = vector.shape_cast %43 : vector<128xf32> to vector<1x128xf32>
    %c0_11 = arith.constant 0 : index
    %c0_12 = arith.constant 0 : index
    %45 = vector.load %arg3[%c0_11, %c0_12] : memref<1x128xf32, #tpu.memory_space<vmem>>, vector<1x128xf32>
    tpu.vector_store %arg3[%c0_11, %c0_12], %44 {strides = array<i32>} : memref<1x128xf32, #tpu.memory_space<vmem>>, vector<1x128xf32>,
    return
  }
}

</mosaic_0001>

<llo_original>
// kernel: tpu_custom_call.1
$region0: #{tpu_custom_call.1}
  #allocation0 [shape = 'u32[]', space=smem, size = 0x4, offset = 0x4, fixed_abs, tag = 'smem constant byte address 0x4 - core index']
  #allocation1 [shape = 'u32[144,128]{1,0:T(1,128)}', space=vmem, size = 0x12000, scoped, tag = 'internal scratch']
  %s0 = inlined_call_operand.vmem [shape: f32[16,1], index: 0, kind: input, shape index: {}]
  %s1 = inlined_call_operand.vmem [shape: s32[2,32], index: 1, kind: input, shape index: {}]
  %s2 = inlined_call_operand.vmem [shape: f32[3,128], index: 2, kind: input, shape index: {}]
  %s3 = inlined_call_operand.hbm [shape: f32[1,128], index: 3, kind: output, shape index: {}]
  %s4 = sld [smem:[#allocation0]]
  $region22: #{tpu_custom_call.1} parent=0
    _
  %s6 = ssub.s32 1, %s4
  %s7 = scalar_select 0, %s6, %s4
  $region1: #{tpu_custom_call.1} parent=0
    #allocation2 [shape = 'u8[512]{0}', space=vmem, size = 0x400, scoped, tag = 'output window, operand 0, single buffered']
    #allocation3 [shape = 's32[1]{0}', space=sflag, size = 0x4, scoped, tag = 'scoped memory for tpu_custom_call.1']
    %8 = vsyncpa [#allocation3], 0
    // Predicated region
    $region2: #{tpu_custom_call.1} parent=1 // pred_check
      _
    $region3: #{tpu_custom_call.1} parent=1 // pred_check_branch
      %10 = sbr.rel (0) target = $region5
    $region4: #{tpu_custom_call.1} parent=1 // pred_region
      _
    $region5: #{tpu_custom_call.1} parent=1 // pred_fallthru
      _
    // Predicated region
    $region6: #{tpu_custom_call.1} parent=1 // pred_check
      _
    $region7: #{tpu_custom_call.1} parent=1 // pred_check_branch
      %12 = sbr.rel (0) target = $region9
    $region8: #{tpu_custom_call.1} parent=1 // pred_region
      _
    $region9: #{tpu_custom_call.1} parent=1 // pred_fallthru
      _
    // Predicated region
    $region10: #{tpu_custom_call.1} parent=1 // pred_check
      _
    $region11: #{tpu_custom_call.1} parent=1 // pred_check_branch
      %14 = sbr.rel (0) target = $region13
    $region12: #{tpu_custom_call.1} parent=1 // pred_region
      _
    $region13: #{tpu_custom_call.1} parent=1 // pred_fallthru
      _
    %v16 = vld [vmem:[%s0] sm:$0xff]
    %v17 = vld [vmem:[%s0 + $0x8] sm:$0xff]
    %v18 = vld [vmem:[%s1] sm:$0x3]
    %v19 = vld [vmem:[%s2] sm:$0x7]
    %v20 = vlaneseq
    %v21 = vshrl.u32 %v20, 7
    %v22 = vadd.s32 %v21, 8
    %v23 = vlaneseq
    %v24 = vshrl.u32 %v23, 7
    %v25 = vsub.s32 0, %v24
    %v26 = vrot.slane %v18, %v25
    %vm27 = vcmp.eq.s32.totalorder %v26, %v21
    %vm28 = vcmp.eq.s32.totalorder %v26, %v22
    %30 = vset.pattern.permute.xlu0 0
    %31 = vperm.xlu0 %30, %v16
    %v32 = vpop.permute.xlu0 %31
    %35 = vset.pattern.permute.xlu0 0
    %36 = vperm.xlu0 %35, %v17
    %v37 = vpop.permute.xlu0 %36
    %v39 = vsel %vm27, %v32, 0.0
    %v40 = vsel %vm28, %v37, 0.0
    %vm41 = vcmask 261120
    %v42 = vsel %vm41, %v39, 0.0
    %v43 = vsel %vm41, %v40, 0.0
    %v44 = vadd.f32 %v42, %v43
    %v45 = vrot.slane %v44, 4
    %v46 = vadd.f32 %v44, %v45
    %v47 = vrot.slane %v46, 2
    %v48 = vadd.f32 %v46, %v47
    %v49 = vrot.slane %v48, 1
    %v50 = vadd.f32 %v48, %v49
    %v51 = vlaneseq
    %v52 = vshrl.u32 %v51, 7
    %v53 = vsub.s32 1, %v52
    %v54 = vrot.slane %v18, %v53
    %vm55 = vcmp.eq.s32.totalorder %v54, %v21
    %vm56 = vcmp.eq.s32.totalorder %v54, %v22
    %v57 = vsel %vm55, 1, 0
    %v58 = vsel %vm56, 1, 0
    %v59 = vcvt.s32.f32 %v57
    %v60 = vcvt.s32.f32 %v58
    %v61 = vsel %vm41, %v59, 0.0
    %62 = vadd.xlane.f32.xlu0 %v61
    %v63 = vpop.xlane.xlu0 %62
    %v64 = vsel %vm41, %v60, 0.0
    %65 = vadd.xlane.f32.xlu0 %v64
    %v66 = vpop.xlane.xlu0 %65
    %v67 = vsel %vm55, %v50, 0.0
    %v68 = vsel %vm56, %v50, 0.0
    %v69 = vpack.c.bf16 %v68, %v67
    %v70 = vpack.c.bf16 %v19, %v19
    %v72 = vpack.i.b16 %v70, %v70
    %v74 = vlaneseq
    %v75 = vshrl.u32 %v74, 7
    %v76 = vsub.s32 0, %v75
    %v77 = vrot.slane %v72, %v76
    %v79 = vsel %vm41, %v69, 0
    %81 = vmatprep.subr.bf16.mxu0 0
    %82 = vmatpush1.bf16.msra.mxu0 %v77
    %83 = vmatprep.subr.bf16.mxu0 0
    %84 = vmatpush1.bf16.msra.mxu0 %v77
    %85 = vmatprep.subr.bf16.mxu0 0
    %86 = vmatpush1.bf16.msra.mxu0 0
    %87 = vmatprep.subr.bf16.mxu0 0
    %88 = vmatpush1.bf16.msra.mxu0 0
    %89 = vmatprep.subr.bf16.mxu0 0
    %90 = vmatpush1.bf16.msra.mxu0 0
    %91 = vmatprep.subr.bf16.mxu0 0
    %92 = vmatpush1.bf16.msra.mxu0 0
    %93 = vmatprep.subr.bf16.mxu0 0
    %94 = vmatpush1.bf16.msra.mxu0 0
    %95 = vmatprep.subr.bf16.mxu0 0
    %96 = vmatpush1.bf16.msra.mxu0 0
    %97 = vmatprep.subr.bf16.mxu0 0
    %98 = vmatpush1.bf16.msra.mxu0 0
    %99 = vmatprep.subr.bf16.mxu0 0
    %100 = vmatpush1.bf16.msra.mxu0 0
    %101 = vmatprep.subr.bf16.mxu0 0
    %102 = vmatpush1.bf16.msra.mxu0 0
    %103 = vmatprep.subr.bf16.mxu0 0
    %104 = vmatpush1.bf16.msra.mxu0 0
    %105 = vmatprep.subr.bf16.mxu0 0
    %106 = vmatpush1.bf16.msra.mxu0 0
    %107 = vmatprep.subr.bf16.mxu0 0
    %108 = vmatpush1.bf16.msra.mxu0 0
    %109 = vmatprep.subr.bf16.mxu0 0
    %110 = vmatpush1.bf16.msra.mxu0 0
    %111 = vmatprep.subr.bf16.mxu0 0
    %112 = vmatpush1.bf16.msra.mxu0 0
    %113 = vmatprep.mubr.bf16.mxu0 0
    %114 = vmatmul.mubr.bf16.gmra.mrb[0].mxu0 %v79
    %v115 = vpop.f32.mrb[0].mxu0
    %v116 = vadd.f32 0.0, %v115
    %v117 = vpop.f32.mrb[0].mxu0
    %v118 = vpop.f32.mrb[0].mxu0
    %v119 = vadd.f32 0.0, %v118
    %v120 = vpop.f32.mrb[0].mxu0
    %121 = vdwg.mxu0
    %v122 = vmax.f32 %v63, 1.0
    %v123 = vmax.f32 %v66, 1.0
    %v124 = vrcp.pop %v122
    %v125 = vrcp.pop %v123
    %v126 = vmul.f32 %v116, %v124
    %v127 = vmul.f32 %v119, %v125
    %v128 = vlaneseq
    %v129 = vshrl.u32 %v128, 7
    %v130 = vsub.s32 1, %v129
    %v131 = vrot.slane %v19, %v130
    %v132 = vmul.f32 %v32, %v131
    %v133 = vmul.f32 %v37, %v131
    %v134 = vadd.f32 %v126, %v132
    %v135 = vadd.f32 %v127, %v133
    %v136 = vlaneseq
    %v137 = vshrl.u32 %v136, 7
    %v138 = vsub.s32 2, %v137
    %v139 = vrot.slane %v19, %v138
    %v140 = vadd.f32 %v134, %v139
    %v141 = vadd.f32 %v135, %v139
    %v142 = vmax.f32 %v140, %v141
    %v143 = vrot.slane %v142, 4
    %v144 = vmax.f32 %v142, %v143
    %v145 = vrot.slane %v144, 2
    %v146 = vmax.f32 %v144, %v145
    %v147 = vrot.slane %v146, 1
    %v148 = vmax.f32 %v146, %v147
    %149 = vst [vmem:[#allocation2] sm:$0x1] %v148
    // Predicated region
    $region14: #{tpu_custom_call.1} parent=1 // pred_check
      _
    $region15: #{tpu_custom_call.1} parent=1 // pred_check_branch
      %151 = sbr.rel (0) target = $region17
    $region16: #{tpu_custom_call.1} parent=1 // pred_region
      %s153 = ssub.s32 16, 16
      %154 = vsyncadd [#allocation3], %s153
      %s156 = sshll.u32 [#allocation2], 4
      %s157 = int_to_ptr.vmem [resolvable:$true] %s156
      %159 = dma.vmem_to_hbm [thread:$0]  %s157, 16, %s3, [#allocation3]
    $region17: #{tpu_custom_call.1} parent=1 // pred_fallthru
      _
    // Predicated region
    $region18: #{tpu_custom_call.1} parent=1 // pred_check
      _
    $region19: #{tpu_custom_call.1} parent=1 // pred_check_branch
      %161 = sbr.rel (0) target = $region21
    $region20: #{tpu_custom_call.1} parent=1 // pred_region
      %162 = dma.done [#allocation3], 16
    $region21: #{tpu_custom_call.1} parent=1 // pred_fallthru
      _
    %163 = vsyncpa [#allocation3], 1

</llo_original>
